<compile_context>
chip_gen: v5e
topology: v5e:2x2
jax: 0.10.0
libtpu: 0.0.40
codegen_flags: <defaults>
</compile_context>

<pallas_src>
import functools

import jax
import jax.numpy as jnp
from jax.experimental import pallas as pl
from jax.experimental.pallas import tpu as pltpu


# ---------------------------------------------------------------------------
# Hardware-aware configuration
# ---------------------------------------------------------------------------
def _round_up(x: int, m: int) -> int:
    return ((x + m - 1) // m) * m


def _sublane_multiple(dtype) -> int:
    # f32 -> 8, bf16 -> 16, int8/fp8 -> 32 (native packed sublane tile).
    return max(8, 32 // jnp.dtype(dtype).itemsize)


@functools.lru_cache(maxsize=1)
def _hw_config():
    """Tile caps + VMEM limit derived from the TPU generation."""
    kind = ""
    try:
        kind = jax.devices()[0].device_kind.lower()
    except Exception:  # pragma: no cover - defensive
        pass

    try:
        vmem_bytes = int(pltpu.get_tpu_info().vmem_capacity_bytes)
    except Exception:  # fall back to generation heuristics
        vmem_bytes = (64 if "v7" in kind else 128) * 1024 * 1024

    is_v5e = ("v5e" in kind) or ("v5 lite" in kind) or ("v5litepod" in kind)
    is_v7 = "v7" in kind

    if is_v5e:
        # 4x128x128 MXUs -> 128-multiples; bigger tk amortizes the acc RMW
        # (v5e has a single vst slot).
        tm_cap, tn_cap, tk_cap = 512, 1024, 512
    elif is_v7:
        # 2x256x256 MXU, but only 64 MiB VMEM -> moderate tiles.
        tm_cap, tn_cap, tk_cap = 512, 1024, 512
    else:
        # v6e (and other 128 MiB VMEM parts): 2x256x256 MXU, room for wide N.
        tm_cap, tn_cap, tk_cap = 512, 2048, 512

    # ~75% of physical VMEM (96 MiB on v5e/v6e, 48 MiB on v7x) leaves headroom
    # for Mosaic internal scratch + double-buffers.
    vmem_limit = min(100 * 1024 * 1024, (vmem_bytes * 3) // 4)
    return {"tm": tm_cap, "tn": tn_cap, "tk": tk_cap, "vmem_limit": vmem_limit}


def _plan_kn(K: int, N: int, hw):
    """Pick (tk, Kp, tn, Np): full extent when small, capped tile otherwise."""
    tk_cap, tn_cap = hw["tk"], hw["tn"]
    if K <= tk_cap:
        tk_, Kp = K, K                      # full-extent block, no padding
    else:
        tk_, Kp = tk_cap, _round_up(K, tk_cap)
    if N <= tn_cap:
        tn_, Np = N, N
    else:
        tn_, Np = tn_cap, _round_up(N, tn_cap)
    return tk_, Kp, tn_, Np


def _plan_m(M: int, dtype, hw):
    sub = _sublane_multiple(dtype)
    tm_cap = hw["tm"]
    if M <= tm_cap:
        tm_ = _round_up(M, sub)
        Mp = tm_
    else:
        tm_ = tm_cap
        Mp = _round_up(M, tm_cap)
    return tm_, Mp


def pad_linear_params(W: jax.Array, b: jax.Array):
    """Pad W / b once (cold path) so repeated forward calls never pad them."""
    K, N = W.shape
    hw = _hw_config()
    _, Kp, _, Np = _plan_kn(K, N, hw)
    Wp = W if (Kp, Np) == (K, N) else jnp.pad(W, ((0, Kp - K), (0, Np - N)))
    b2 = jnp.asarray(b).reshape(1, -1)
    if b2.shape[1] != Np:
        b2 = jnp.pad(b2, ((0, 0), (0, Np - b2.shape[1])))
    return Wp, b2


# ---------------------------------------------------------------------------
# Kernels
# ---------------------------------------------------------------------------
def _make_kernels(precision):
    def kernel_f32_out(x_ref, w_ref, b_ref, o_ref):
        """f32 output: accumulate directly into the resident output block."""
        k = pl.program_id(2)

        @pl.when(k == 0)
        def _init():
            # Fold the bias into the accumulator init (no epilogue pass).
            o_ref[...] = jnp.broadcast_to(
                b_ref[...].astype(jnp.float32), o_ref.shape
            )

        o_ref[...] += jnp.dot(
            x_ref[...], w_ref[...],
            preferred_element_type=jnp.float32,
            precision=precision,
        )

    def kernel_acc(x_ref, w_ref, b_ref, o_ref, acc_ref):
        """Non-f32 output: f32 scratch accumulator + cast epilogue."""
        k = pl.program_id(2)

        @pl.when(k == 0)
        def _init():
            acc_ref[...] = jnp.broadcast_to(
                b_ref[...].astype(jnp.float32), acc_ref.shape
            )

        acc_ref[...] += jnp.dot(
            x_ref[...], w_ref[...],
            preferred_element_type=jnp.float32,
            precision=precision,
        )

        @pl.when(k == pl.num_programs(2) - 1)
        def _finalize():
            o_ref[...] = acc_ref[...].astype(o_ref.dtype)

    return kernel_f32_out, kernel_acc


# ---------------------------------------------------------------------------
# Wrapper
# ---------------------------------------------------------------------------
def linear_forward(
    x: jax.Array,
    W: jax.Array,
    b: jax.Array,
    *,
    d_out: int | None = None,
    precision=None,
) -> jax.Array:
    """Compute x @ W + b with a tiled Pallas TPU matmul kernel.

    x : (..., d_in)   W : (K, N) possibly pre-padded   b : (1, N) or (N,)
    d_out : logical output width (defaults to W.shape[1]).
    precision : pass jax.lax.Precision.HIGHEST for bit-accurate f32 at large K.
    """
    orig_lead = x.shape[:-1]
    K_w, N = W.shape
    if d_out is None:
        d_out = N
    out_dtype = jnp.result_type(x.dtype, W.dtype)

    x2d = x.reshape(-1, x.shape[-1])
    M, Kx = x2d.shape

    hw = _hw_config()
    tk_, Kp, tn_, Np = _plan_kn(K_w, N, hw)
    tm_, Mp = _plan_m(M, x2d.dtype, hw)

    # Hot path: only the activation may need padding (W / b should already be
    # pre-padded via pad_linear_params; the `if` guards skip no-op pads).
    if (Mp, Kp) != (M, Kx):
        x2d = jnp.pad(x2d, ((0, Mp - M), (0, Kp - Kx)))
    Wp = W if (Kp, Np) == (K_w, N) else jnp.pad(W, ((0, Kp - K_w), (0, Np - N)))
    b2 = jnp.asarray(b).reshape(1, -1)
    if b2.shape[1] != Np:
        b2 = jnp.pad(b2, ((0, 0), (0, Np - b2.shape[1])))

    gm, gn, gk = Mp // tm_, Np // tn_, Kp // tk_

    kernel_f32_out, kernel_acc = _make_kernels(precision)
    direct_f32 = out_dtype == jnp.float32
    kernel = kernel_f32_out if direct_f32 else kernel_acc
    scratch = [] if direct_f32 else [pltpu.VMEM((tm_, tn_), jnp.float32)]

    # v7x megacore: lead with a parallel axis that actually has >1 block
    # (small-batch inference often collapses the M axis to a single block).
    swap_mn = (gm == 1) and (gn > 1)
    if swap_mn:
        grid = (gn, gm, gk)
        x_map = lambda j, i, k: (i, k)
        w_map = lambda j, i, k: (k, j)
        b_map = lambda j, i, k: (0, j)
        o_map = lambda j, i, k: (i, j)
    else:
        grid = (gm, gn, gk)
        x_map = lambda i, j, k: (i, k)
        w_map = lambda i, j, k: (k, j)
        b_map = lambda i, j, k: (0, j)
        o_map = lambda i, j, k: (i, j)

    cost = pl.CostEstimate(
        flops=2 * M * K_w * N,
        transcendentals=0,
        bytes_accessed=(
            M * K_w * jnp.dtype(x.dtype).itemsize
            + K_w * N * jnp.dtype(W.dtype).itemsize
            + N * jnp.dtype(b2.dtype).itemsize
            + M * N * jnp.dtype(out_dtype).itemsize
        ),
    )

    out = pl.pallas_call(
        kernel,
        out_shape=jax.ShapeDtypeStruct((Mp, Np), out_dtype),
        grid_spec=pltpu.PrefetchScalarGridSpec(
            num_scalar_prefetch=0,
            grid=grid,
            in_specs=[
                # NOTE: if profiles still show exposed DMA at these tile sizes,
                # add pipeline_mode=pl.Buffered(3) to the x / W specs.
                pl.BlockSpec((tm_, tk_), x_map),   # x tile
                pl.BlockSpec((tk_, tn_), w_map),   # W tile
                pl.BlockSpec((1, tn_), b_map),     # bias tile
            ],
            out_specs=pl.BlockSpec((tm_, tn_), o_map),
            scratch_shapes=scratch,
        ),
        compiler_params=pltpu.CompilerParams(
            # M/N tiles are independent (megacore-shardable); K is a reduction.
            dimension_semantics=("parallel", "parallel", "arbitrary"),
            vmem_limit_bytes=hw["vmem_limit"],
        ),
        cost_estimate=cost,
    )(x2d, Wp, b2)

    if (Mp, Np) != (M, d_out):
        out = out[:M, :d_out]
    return out.reshape(*orig_lead, d_out)


# ---------------------------------------------------------------------------
# Module port
# ---------------------------------------------------------------------------
class Linear:
    """JAX/Pallas port of the PyTorch Linear module (forward hot path in Pallas)."""

    def __init__(self, d_in: int, d_out: int, key=None, dtype=jnp.float32):
        if key is None:
            key = jax.random.PRNGKey(0)
        k_w, k_b = jax.random.split(key)
        init_bound = 1.0 / (d_in ** 0.5)
        self.W = jax.random.uniform(
            k_w, (d_in, d_out), dtype=dtype, minval=-init_bound, maxval=init_bound
        )
        self.b = jax.random.uniform(
            k_b, (1, d_out), dtype=dtype, minval=-init_bound, maxval=init_bound
        )
        self.gW = jnp.zeros_like(self.W)
        self.gb = jnp.zeros_like(self.b)
        self.context = {}
        self._d_out = d_out
        # Pre-pad parameters once so the per-call forward never pads W / b.
        self._Wp, self._bp = pad_linear_params(self.W, self.b)

    def refresh_params(self):
        """Call after mutating self.W / self.b (e.g. an optimizer step)."""
        self._Wp, self._bp = pad_linear_params(self.W, self.b)

    def forward(self, input):
        self.context["input"] = input
        return linear_forward(input, self._Wp, self._bp, d_out=self._d_out)

    def backward(self, output):
        # TODO(synk): backward/grad-accumulation kept in plain JAX (cold path).
        inp = self.context["input"]
        self.gW = self.gW + (inp.T @ output) / inp.shape[0]
        self.gb = self.gb + output.sum(axis=0, keepdims=True) / inp.shape[0]
        return output @ self.W.T

    def parameters(self):
        return [[self.W, self.gW], [self.b, self.gb]]


# ---------------------------------------------------------------------------
# Demo / correctness check
# ---------------------------------------------------------------------------
if __name__ == "__main__":
    key = jax.random.PRNGKey(0)
    k_x, k_layer, k_x3 = jax.random.split(key, 3)

    # Small shapes consistent with the module: batch=8, d_in=32, d_out=64.
    batch, d_in, d_out = 8, 32, 64
    x = jax.random.normal(k_x, (batch, d_in), dtype=jnp.float32)

    layer = Linear(d_in, d_out, key=k_layer)
    y = jax.block_until_ready(layer.forward(x))

    # Correctness check vs. pure JAX reference.
    ref = x @ layer.W + layer.b
    assert y.shape == (batch, d_out) and y.dtype == ref.dtype
    assert jnp.allclose(y, ref, atol=1e-5, rtol=1e-5), "Pallas Linear mismatch"

    # 3-D input (leading dims flattened inside the wrapper).
    x3 = jax.random.normal(k_x3, (2, 4, d_in), dtype=jnp.float32)
    y3 = jax.block_until_ready(linear_forward(x3, layer.W, layer.b))
    ref3 = x3 @ layer.W + layer.b
    assert y3.shape == ref3.shape
    assert jnp.allclose(y3, ref3, atol=1e-5, rtol=1e-5), "3-D input mismatch"

    # Quick exercise of backward glue (not the Pallas hot path).
    _ = jax.block_until_ready(layer.backward(jnp.ones_like(y)))

    print("KERNEL_OK")
</pallas_src>

<mosaic_0001>
module attributes {stable_mosaic.version = 11 : i64} {
  func.func @kernel_f32_out(%arg0: i32, %arg1: i32, %arg2: i32, %arg3: memref<8x32xf32, #tpu.memory_space<vmem>>, %arg4: memref<32x64xf32, #tpu.memory_space<vmem>>, %arg5: memref<1x64xf32, #tpu.memory_space<vmem>>, %arg6: memref<8x64xf32, #tpu.memory_space<vmem>>) attributes {dimension_semantics = [#tpu.dimension_semantics<parallel>, #tpu.dimension_semantics<parallel>, #tpu.dimension_semantics<arbitrary>], iteration_bounds = array<i64: 1, 1, 1>, scalar_prefetch = 0 : i64, scratch_operands = 0 : i64, tpu.core_type = #tpu.core_type<tc>, window_params = [{transform_indices = @transform_0, window_bounds = array<i64: 8, 32>}, {transform_indices = @transform_1, window_bounds = array<i64: 32, 64>}, {transform_indices = @transform_2, window_bounds = array<i64: 1, 64>}, {transform_indices = @transform_3, window_bounds = array<i64: 8, 64>}]} {
    %c0_i32 = arith.constant 0 : i32
    %0 = arith.cmpi eq, %arg2, %c0_i32 : i32
    %1 = arith.extui %0 : i1 to i32
    %c0_i32_0 = arith.constant 0 : i32
    %2 = arith.cmpi ne, %1, %c0_i32_0 : i32
    scf.if %2 {
      %c0_8 = arith.constant 0 : index
      %c0_9 = arith.constant 0 : index
      %9 = vector.load %arg5[%c0_8, %c0_9] : memref<1x64xf32, #tpu.memory_space<vmem>>, vector<1x64xf32>
      %10 = vector.shape_cast %9 : vector<1x64xf32> to vector<1x64xf32>
      %11 = vector.broadcast %10 : vector<1x64xf32> to vector<8x64xf32>
      %c0_10 = arith.constant 0 : index
      %c0_11 = arith.constant 0 : index
      %12 = vector.load %arg6[%c0_10, %c0_11] : memref<8x64xf32, #tpu.memory_space<vmem>>, vector<8x64xf32>
      tpu.vector_store %arg6[%c0_10, %c0_11], %11 {strides = array<i32>} : memref<8x64xf32, #tpu.memory_space<vmem>>, vector<8x64xf32>,
    } else {
    }
    %c0 = arith.constant 0 : index
    %c0_1 = arith.constant 0 : index
    %3 = vector.load %arg6[%c0, %c0_1] : memref<8x64xf32, #tpu.memory_space<vmem>>, vector<8x64xf32>
    %c0_2 = arith.constant 0 : index
    %c0_3 = arith.constant 0 : index
    %4 = vector.load %arg3[%c0_2, %c0_3] : memref<8x32xf32, #tpu.memory_space<vmem>>, vector<8x32xf32>
    %c0_4 = arith.constant 0 : index
    %c0_5 = arith.constant 0 : index
    %5 = vector.load %arg4[%c0_4, %c0_5] : memref<32x64xf32, #tpu.memory_space<vmem>>, vector<32x64xf32>
    %cst = arith.constant dense<0.000000e+00> : vector<8x64xf32>
    %6 = tpu.matmul %4, %5, %cst {dimension_numbers = #tpu.dot_dimension_numbers<[1], [0], [0], [1], [0, 0, 1, 1], [], []>} : vector<8x32xf32>, vector<32x64xf32>, vector<8x64xf32> -> vector<8x64xf32>
    %7 = arith.addf %3, %6 : vector<8x64xf32>
    %c0_6 = arith.constant 0 : index
    %c0_7 = arith.constant 0 : index
    %8 = vector.load %arg6[%c0_6, %c0_7] : memref<8x64xf32, #tpu.memory_space<vmem>>, vector<8x64xf32>
    tpu.vector_store %arg6[%c0_6, %c0_7], %7 {strides = array<i32>} : memref<8x64xf32, #tpu.memory_space<vmem>>, vector<8x64xf32>,
    return
  }
  func.func @transform_0(%arg0: i32, %arg1: i32, %arg2: i32) -> (i32, i32) {
    %c0_i32 = arith.constant 0 : i32
    return %arg0, %arg2 : i32, i32
  }
  func.func @transform_1(%arg0: i32, %arg1: i32, %arg2: i32) -> (i32, i32) {
    %c0_i32 = arith.constant 0 : i32
    return %arg2, %arg1 : i32, i32
  }
  func.func @transform_2(%arg0: i32, %arg1: i32, %arg2: i32) -> (i32, i32) {
    %c0_i32 = arith.constant 0 : i32
    %c0_i32_0 = arith.constant 0 : i32
    return %c0_i32, %arg1 : i32, i32
  }
  func.func @transform_3(%arg0: i32, %arg1: i32, %arg2: i32) -> (i32, i32) {
    %c0_i32 = arith.constant 0 : i32
    return %arg0, %arg1 : i32, i32
  }
}

</mosaic_0001>

<llo_original>
// kernel: tpu_custom_call.1
$region0: #{tpu_custom_call.1}
  #allocation0 [shape = 'u32[]', space=smem, size = 0x4, offset = 0x4, fixed_abs, tag = 'smem constant byte address 0x4 - core index']
  #allocation1 [shape = 'u32[72,128]{1,0:T(1,128)}', space=vmem, size = 0x9000, scoped, tag = 'internal scratch']
  %s0 = inlined_call_operand.hbm [shape: f32[8,32], index: 0, kind: input, shape index: {}]
  %s1 = inlined_call_operand.hbm [shape: f32[32,64], index: 1, kind: input, shape index: {}]
  %s2 = inlined_call_operand.vmem [shape: f32[1,64], index: 2, kind: input, shape index: {}]
  %s3 = inlined_call_operand.hbm [shape: f32[8,64], index: 3, kind: output, shape index: {}]
  %s4 = sld [smem:[#allocation0]]
  $region34: #{tpu_custom_call.1} parent=0
    _
  %s6 = ssub.s32 1, %s4
  %s7 = scalar_select 0, %s6, %s4
  $region1: #{tpu_custom_call.1} parent=0
    #allocation2 [shape = 'u8[4096]{0}', space=vmem, size = 0x1000, scoped, tag = 'input window, operand 0, single buffered']
    #allocation3 [shape = 's32[1]{0}', space=sflag, size = 0x4, scoped, tag = 'scoped memory for tpu_custom_call.1']
    #allocation4 [shape = 's32[1]{0}', space=sflag, size = 0x4, scoped, tag = 'scoped memory for tpu_custom_call.1']
    #allocation5 [shape = 'u8[16384]{0}', space=vmem, size = 0x4000, scoped, tag = 'input window, operand 1, single buffered']
    #allocation6 [shape = 's32[1]{0}', space=sflag, size = 0x4, scoped, tag = 'scoped memory for tpu_custom_call.1']
    #allocation7 [shape = 'u8[4096]{0}', space=vmem, size = 0x1000, scoped, tag = 'output window, operand 0, single buffered']
    %8 = vsyncpa [#allocation3], 0
    %9 = vsyncpa [#allocation6], 0
    %10 = vsyncpa [#allocation4], 0
    // Predicated region
    $region2: #{tpu_custom_call.1} parent=1 // pred_check
      _
    $region3: #{tpu_custom_call.1} parent=1 // pred_check_branch
      %12 = sbr.rel (0) target = $region5
    $region4: #{tpu_custom_call.1} parent=1 // pred_region
      %14 = vsyncadd [#allocation3], 0
      %s16 = sshll.u32 %s0, 4
      %s17 = int_to_ptr.hbm [resolvable:$true] %s16
      %s18 = sshll.u32 [#allocation2], 4
      %s19 = int_to_ptr.vmem [resolvable:$true] %s18
      %21 = dma.hbm_to_vmem [thread:$0]  %s17, 128, %s19, [#allocation3]
    $region5: #{tpu_custom_call.1} parent=1 // pred_fallthru
      _
    // Predicated region
    $region6: #{tpu_custom_call.1} parent=1 // pred_check
      _
    $region7: #{tpu_custom_call.1} parent=1 // pred_check_branch
      %23 = sbr.rel (0) target = $region9
    $region8: #{tpu_custom_call.1} parent=1 // pred_region
      %25 = vsyncadd [#allocation6], 0
      %s26 = sshll.u32 %s1, 4
      %s27 = int_to_ptr.hbm [resolvable:$true] %s26
      %s28 = sshll.u32 [#allocation5], 4
      %s29 = int_to_ptr.vmem [resolvable:$true] %s28
      %34 = dma.hbm_to_vmem [thread:$0]  %s27, 512, %s29, [#allocation6], 128, 128, 8
    $region9: #{tpu_custom_call.1} parent=1 // pred_fallthru
      _
    // Predicated region
    $region10: #{tpu_custom_call.1} parent=1 // pred_check
      _
    $region11: #{tpu_custom_call.1} parent=1 // pred_check_branch
      %36 = sbr.rel (0) target = $region13
    $region12: #{tpu_custom_call.1} parent=1 // pred_region
      _
    $region13: #{tpu_custom_call.1} parent=1 // pred_fallthru
      _
    // Predicated region
    $region14: #{tpu_custom_call.1} parent=1 // pred_check
      _
    $region15: #{tpu_custom_call.1} parent=1 // pred_check_branch
      %38 = sbr.rel (0) target = $region17
    $region16: #{tpu_custom_call.1} parent=1 // pred_region
      %40 = dma.done [#allocation3], 128
    $region17: #{tpu_custom_call.1} parent=1 // pred_fallthru
      _
    // Predicated region
    $region18: #{tpu_custom_call.1} parent=1 // pred_check
      _
    $region19: #{tpu_custom_call.1} parent=1 // pred_check_branch
      %42 = sbr.rel (0) target = $region21
    $region20: #{tpu_custom_call.1} parent=1 // pred_region
      %44 = dma.done [#allocation6], 512
    $region21: #{tpu_custom_call.1} parent=1 // pred_fallthru
      _
    %p45 = scmp.eq.s32.totalorder 0, 0
    // Predicated region
    $region22: #{tpu_custom_call.1} parent=1 // pred_check
      %p46 = pneg %p45
    $region23: #{tpu_custom_call.1} parent=1 // pred_check_branch
      %48 = sbr.rel (%p46) target = $region25
    $region24: #{tpu_custom_call.1} parent=1 // pred_region
      %v49 = vld [vmem:[%s2] sm:$0x1]
      %v51 = vperm.slane %v49, 0
      %vm53 = vcmask 523264
      %54 = vst.msk [vmem:[#allocation7] sm:$0xff] %vm53, %v51
    $region25: #{tpu_custom_call.1} parent=1 // pred_fallthru
      _
    %v55 = vld [vmem:[#allocation7] sm:$0xff]
    %v56 = vld [vmem:[#allocation2] sm:$0xff]
    %v57 = vld [vmem:[#allocation5] sm:$0xff]
    %v58 = vld [vmem:[#allocation5 + $0x8] sm:$0xff]
    %v59 = vld [vmem:[#allocation5 + $0x10] sm:$0xff]
    %v60 = vld [vmem:[#allocation5 + $0x18] sm:$0xff]
    %vm61 = vcmask 261120
    %v63 = vsel %vm61, %v56, 0
    %65 = vmatpush.msra.mxu0 0.0
    %66 = vmatpush.msra.mxu0 0.0
    %67 = vmatpush.msra.mxu0 0.0
    %68 = vmatpush.msra.mxu0 0.0
    %69 = vmatpush.msra.mxu0 0.0
    %70 = vmatpush.msra.mxu0 0.0
    %71 = vmatpush.msra.mxu0 0.0
    %72 = vmatpush.msra.mxu0 0.0
    %73 = vmatpush.msra.mxu0 0.0
    %74 = vmatpush.msra.mxu0 0.0
    %75 = vmatpush.msra.mxu0 0.0
    %76 = vmatpush.msra.mxu0 0.0
    %77 = vmatpush.msra.mxu0 %v60
    %78 = vmatpush.msra.mxu0 %v59
    %79 = vmatpush.msra.mxu0 %v58
    %80 = vmatpush.msra.mxu0 %v57
    %81 = vmatmul.f32.gmra.mxu0 %v63
    %v82 = vpop.f32.mrf.mxu0
    %v83 = vadd.f32 0.0, %v82
    %84 = vdwg.mxu0
    %v85 = vadd.f32 %v55, %v83
    %vm86 = vcmask 523264
    %87 = vst.msk [vmem:[#allocation7] sm:$0xff] %vm86, %v85
    // Predicated region
    $region26: #{tpu_custom_call.1} parent=1 // pred_check
      _
    $region27: #{tpu_custom_call.1} parent=1 // pred_check_branch
      %89 = sbr.rel (0) target = $region29
    $region28: #{tpu_custom_call.1} parent=1 // pred_region
      %91 = vsyncadd [#allocation4], 0
      %s93 = sshll.u32 [#allocation7], 4
      %s94 = int_to_ptr.vmem [resolvable:$true] %s93
      %s95 = sshll.u32 %s3, 4
      %s96 = int_to_ptr.hbm [resolvable:$true] %s95
      %98 = dma.vmem_to_hbm [thread:$0]  %s94, 128, %s96, [#allocation4]
    $region29: #{tpu_custom_call.1} parent=1 // pred_fallthru
      _
    // Predicated region
    $region30: #{tpu_custom_call.1} parent=1 // pred_check
      _
    $region31: #{tpu_custom_call.1} parent=1 // pred_check_branch
      %100 = sbr.rel (0) target = $region33
    $region32: #{tpu_custom_call.1} parent=1 // pred_region
      %102 = dma.done [#allocation4], 128
    $region33: #{tpu_custom_call.1} parent=1 // pred_fallthru
      _
    %103 = vsyncpa [#allocation3], 1
    %104 = vsyncpa [#allocation6], 1
    %105 = vsyncpa [#allocation4], 1

</llo_original>
